<compile_context>
chip_gen: v6e
topology: v6e:2x2x1
jax: 0.10.0
libtpu: 0.0.40
codegen_flags: <defaults>
</compile_context>

<pallas_src>
import math
import numpy as np
import jax
import jax.numpy as jnp
from jax.experimental import pallas as pl
from jax.experimental.pallas import tpu as pltpu

# ----------------------- config (args of the module) -----------------------
HIDDEN_DIM = 32          # args.hidden_dim
OUT_DIM = 64             # out_dim
NUM_OBJS = 16            # num_objs
SEMANTIC_DIM = 300
SPATIAL_IN, SPATIAL_OUT = 8, 64
SPATIAL_ALPHA = 0.25     # args.spatial_alpha
# use_spatial_feature = use_tail_semantic_feature = use_spatial_relation = True
SUB_DIM = HIDDEN_DIM + SPATIAL_OUT + SEMANTIC_DIM                     # 396
OBJ_DIM = HIDDEN_DIM + SPATIAL_OUT + SEMANTIC_DIM + SEMANTIC_DIM      # 696

# Packed lane layout of the single [M, 128] activation input (lane-dense).
PACK = 128
C_HEAD = 0                        # 32 lanes: head_feats
C_TAIL = C_HEAD + HIDDEN_DIM      # 32 lanes: tail_feats
C_SP = C_TAIL + HIDDEN_DIM        # 8 lanes : pair spatial-layout feats
C_OH = C_SP + SPATIAL_IN          # 5 lanes : spatial-relation one-hot
C_ONE = C_OH + 5                  # 1 lane  : constant 1.0 (bias row of W1)
C_LOG = PACK - NUM_OBJS           # 16 lanes (112..128): raw obj-label logits
# lanes C_ONE+1 .. C_LOG are zero padding

MAX_TM = 2048                     # max row tile (<< VMEM even double-buffered)


def _round_up(x, m):
    return ((x + m - 1) // m) * m


def _num_tensorcores():
    """Per-chip TensorCore count: 2 on v7x, 1 on v5e/v6e (best-effort detection)."""
    try:
        info = pltpu.get_tpu_info()
        for attr in ("num_cores", "core_count", "num_tensorcores", "tensorcore_count"):
            v = getattr(info, attr, None)
            if isinstance(v, int) and v > 0:
                return min(v, 2)
    except Exception:
        pass
    try:
        kind = jax.devices()[0].device_kind.lower()
        if "v7" in kind or "7x" in kind:
            return 2
    except Exception:
        pass
    return 1


def _choose_row_tile(M, cores):
    if cores >= 2 and M >= 512:
        # v7x: split rows across both TensorCores, each half >= 256 rows.
        return min(MAX_TM, _round_up(-(-M // cores), 16))
    # Single TensorCore (v5e / v6e) or tiny M: one big tile, no forced split.
    return M if M <= MAX_TM else MAX_TM


# --------------------------------- kernel ----------------------------------
def relation_kernel(x_ref, w1_ref, wsem_ref, w2_ref, b2_ref, out_ref):
    f32 = jnp.float32
    x = x_ref[...]                                    # [TM, 128] bf16 packed rows

    # softmax(obj_label_logits) on the statically-sliced logits lanes.
    lg = x[:, C_LOG:].astype(f32)                     # [TM, 16]
    m = jnp.max(lg, axis=-1, keepdims=True)
    e = jnp.exp(lg - m)
    p = e * pl.reciprocal(jnp.sum(e, axis=-1, keepdims=True), approx=True)

    # Layer 1: one K=128 matmul (head/tail/spatial/relation/bias all folded into W1)
    # plus one K=16 matmul feeding the tail-semantic branch with the softmax probs.
    h1 = jnp.dot(x, w1_ref[...], preferred_element_type=f32)
    h1 = h1 + jnp.dot(p.astype(x.dtype), wsem_ref[...], preferred_element_type=f32)
    h1 = jnp.maximum(h1, 0.0)                         # [TM, 128] = [h1 | t1]

    # Layer 2: block-diagonal W2 = diag(ws2, wo2), bias, ReLU.
    h2 = jnp.dot(h1.astype(x.dtype), w2_ref[...], preferred_element_type=f32)
    h2 = jnp.maximum(h2 + b2_ref[...], 0.0)           # [TM, 128] = [h2 | t2]

    # (h2 + t2) / 2 via an XLU lane rotation + add; store the 64-lane result.
    avg = (h2 + pltpu.roll(h2, shift=OUT_DIM, axis=1)) * 0.5
    out_ref[...] = avg[:, :OUT_DIM].astype(out_ref.dtype)


def relation_pallas(packed, folded):
    """packed: [M, 128] bf16; folded: dict of fused weights (W1, W1_sem, W2, b2)."""
    M = packed.shape[0]
    tm = max(1, _choose_row_tile(M, _num_tensorcores()))
    grid = (pl.cdiv(M, tm),)   # ragged last tile handled by Pallas boundary masking

    weights = (folded["w1"], folded["w1_sem"], folded["w2"], folded["b2"])
    in_specs = ([pl.BlockSpec((tm, PACK), lambda i: (i, 0))]
                + [pl.BlockSpec(w.shape, lambda i: (0, 0)) for w in weights])

    return pl.pallas_call(
        relation_kernel,
        out_shape=jax.ShapeDtypeStruct((M, OUT_DIM), jnp.float32),
        grid=grid,
        in_specs=in_specs,
        out_specs=pl.BlockSpec((tm, OUT_DIM), lambda i: (i, 0)),
        compiler_params=pltpu.CompilerParams(dimension_semantics=("parallel",)),
    )(packed, *weights)


# ------------------------------- JAX glue -----------------------------------
def box_cxcywh_to_xyxy(b):
    cx, cy, w, h = b[..., 0], b[..., 1], b[..., 2], b[..., 3]
    return jnp.stack([cx - 0.5 * w, cy - 0.5 * h, cx + 0.5 * w, cy + 0.5 * h], axis=-1)


def pair_spatial_layout_feats(head_xyxy, tail_xyxy):
    # equals extract_spatial_layout_feats(cat([head, tail], 1))[:, i, N+i, :]
    ch = jnp.stack([(head_xyxy[..., 0] + head_xyxy[..., 2]) / 2,
                    (head_xyxy[..., 1] + head_xyxy[..., 3]) / 2], axis=-1)
    ct = jnp.stack([(tail_xyxy[..., 0] + tail_xyxy[..., 2]) / 2,
                    (tail_xyxy[..., 1] + tail_xyxy[..., 3]) / 2], axis=-1)
    dxdy = ch - ct
    dis = jnp.linalg.norm(dxdy, axis=-1, keepdims=True)
    theta = (jnp.arctan2(dxdy[..., 1], dxdy[..., 0]) / np.pi)[..., None]
    area_h = ((head_xyxy[..., 2] - head_xyxy[..., 0]) *
              (head_xyxy[..., 3] - head_xyxy[..., 1]))[..., None]
    area_t = ((tail_xyxy[..., 2] - tail_xyxy[..., 0]) *
              (tail_xyxy[..., 3] - tail_xyxy[..., 1]))[..., None]
    lt = jnp.maximum(head_xyxy[..., :2], tail_xyxy[..., :2])
    rb = jnp.minimum(head_xyxy[..., 2:], tail_xyxy[..., 2:])
    overlap = jnp.prod(jnp.maximum(rb - lt, 0.0), axis=-1, keepdims=True)
    ult = jnp.minimum(head_xyxy[..., :2], tail_xyxy[..., :2])
    urb = jnp.maximum(head_xyxy[..., 2:], tail_xyxy[..., 2:])
    union = jnp.prod(jnp.maximum(urb - ult, 1.0), axis=-1, keepdims=True)
    return jnp.concatenate([dxdy, dis, theta, overlap, union, area_h, area_t], axis=-1)


def generate_spatial_relation(head_b, tail_b, alpha):
    hx, hy = head_b[..., 0], head_b[..., 1]
    tx, ty, tw, th = tail_b[..., 0], tail_b[..., 1], tail_b[..., 2], tail_b[..., 3]
    above = hy > ty + alpha * th
    below = hy < ty - alpha * th
    y_mid = (ty - alpha * th < hy) & (hy < ty + alpha * th)
    around = y_mid & ((hx < tx - alpha * tw) | (hx > tx + alpha * tw))
    within = y_mid & ((hx > tx - alpha * tw) & (hx < tx + alpha * tw))
    contain = tw * th < 1e-5
    rel = (above.astype(jnp.int32) * 1 + below.astype(jnp.int32) * 2
           + around.astype(jnp.int32) * 3 + within.astype(jnp.int32) * 4)
    rel = rel * (1 - contain.astype(jnp.int32))
    return rel


# ------------------------------ parameters ----------------------------------
def kaiming_uniform(key, in_dim, out_dim, a=1.0):
    gain = math.sqrt(2.0 / (1.0 + a * a))
    bound = gain * math.sqrt(3.0 / in_dim)
    return jax.random.uniform(key, (in_dim, out_dim), jnp.float32, -bound, bound)


def init_params(key):
    ks = jax.random.split(key, 8)
    return dict(
        w_sp=kaiming_uniform(ks[0], SPATIAL_IN, SPATIAL_OUT),
        b_sp=jnp.zeros((1, SPATIAL_OUT), jnp.float32),
        label_emb=jax.random.normal(ks[1], (NUM_OBJS, SEMANTIC_DIM), jnp.float32),
        rel_emb_w=jax.random.normal(ks[2], (5, SEMANTIC_DIM), jnp.float32),
        ws1_full=kaiming_uniform(ks[3], SUB_DIM, OUT_DIM),
        bs1=jnp.zeros((1, OUT_DIM), jnp.float32),
        ws2=kaiming_uniform(ks[4], OUT_DIM, OUT_DIM),
        bs2=jnp.zeros((1, OUT_DIM), jnp.float32),
        wo1_full=kaiming_uniform(ks[5], OBJ_DIM, OUT_DIM),
        bo1=jnp.zeros((1, OUT_DIM), jnp.float32),
        wo2=kaiming_uniform(ks[6], OUT_DIM, OUT_DIM),
        bo2=jnp.zeros((1, OUT_DIM), jnp.float32),
    )


def fold_params(p):
    """One-time host-side weight folding into 4 lane-dense arrays.

    W1     [128,128]: rows match the packed activation layout; cols 0..63 feed the sub
                      branch, cols 64..127 feed the obj branch.  Spatial-proj, relation
                      embedding and both layer-1 biases (via the const-1 lane) folded in.
    W1_sem [ 16,128]: softmax-prob rows (label_emb @ wo1_sem), obj half only.
    W2     [128,128]: block-diagonal diag(ws2, wo2).
    b2     [  1,128]: concat(bs2, bo2).
    """
    H, S, SEM, D = HIDDEN_DIM, SPATIAL_OUT, SEMANTIC_DIM, OUT_DIM
    ws1, wo1 = p["ws1_full"], p["wo1_full"]
    ws1_h, ws1_sp, ws1_re = ws1[:H], ws1[H:H + S], ws1[H + S:]
    wo1_t, wo1_sp = wo1[:H], wo1[H:H + S]
    wo1_sem, wo1_re = wo1[H + S:H + S + SEM], wo1[H + S + SEM:]

    w1 = jnp.zeros((PACK, 2 * D), jnp.float32)
    w1 = w1.at[C_HEAD:C_HEAD + H, :D].set(ws1_h)
    w1 = w1.at[C_TAIL:C_TAIL + H, D:].set(wo1_t)
    w1 = w1.at[C_SP:C_SP + SPATIAL_IN, :D].set(p["w_sp"] @ ws1_sp)
    w1 = w1.at[C_SP:C_SP + SPATIAL_IN, D:].set(p["w_sp"] @ wo1_sp)
    w1 = w1.at[C_OH:C_OH + 5, :D].set(p["rel_emb_w"] @ ws1_re)
    w1 = w1.at[C_OH:C_OH + 5, D:].set(p["rel_emb_w"] @ wo1_re)
    w1 = w1.at[C_ONE, :D].set((p["bs1"] + p["b_sp"] @ ws1_sp)[0])
    w1 = w1.at[C_ONE, D:].set((p["bo1"] + p["b_sp"] @ wo1_sp)[0])
    # logits rows (C_LOG:) stay zero: the semantic branch is driven by the in-kernel
    # softmax probabilities through w1_sem.

    w1_sem = jnp.zeros((NUM_OBJS, 2 * D), jnp.float32)
    w1_sem = w1_sem.at[:, D:].set(p["label_emb"] @ wo1_sem)

    w2 = jnp.zeros((2 * D, 2 * D), jnp.float32)
    w2 = w2.at[:D, :D].set(p["ws2"])
    w2 = w2.at[D:, D:].set(p["wo2"])
    b2 = jnp.concatenate([p["bs2"], p["bo2"]], axis=-1)       # [1, 128]

    bf = jnp.bfloat16
    return dict(w1=w1.astype(bf), w1_sem=w1_sem.astype(bf),
                w2=w2.astype(bf), b2=b2.astype(jnp.float32))


# ------------------------------ full forward ---------------------------------
def relation_feature_extractor(folded, head_boxes, tail_boxes, head_feats,
                               tail_feats, obj_label_logits):
    B, N, _ = head_boxes.shape
    head_xyxy = jnp.clip(box_cxcywh_to_xyxy(head_boxes), 0.0, 1.0)
    tail_xyxy = jnp.clip(box_cxcywh_to_xyxy(tail_boxes), 0.0, 1.0)

    sp8 = pair_spatial_layout_feats(head_xyxy, tail_xyxy)              # [B,N,8]
    rel_idx = generate_spatial_relation(head_xyxy, tail_xyxy, SPATIAL_ALPHA)
    onehot = jax.nn.one_hot(rel_idx, 5, dtype=jnp.float32)             # [B,N,5]

    M = B * N
    ones = jnp.ones((M, 1), jnp.float32)
    zpad = jnp.zeros((M, C_LOG - (C_ONE + 1)), jnp.float32)
    packed = jnp.concatenate(
        [head_feats.reshape(M, -1), tail_feats.reshape(M, -1),
         sp8.reshape(M, -1), onehot.reshape(M, -1), ones, zpad,
         obj_label_logits.reshape(M, -1)], axis=-1).astype(jnp.bfloat16)

    out = relation_pallas(packed, folded)
    return out.reshape(B, N, OUT_DIM)


def relation_feature_extractor_ref(params, head_boxes, tail_boxes, head_feats,
                                   tail_feats, obj_label_logits):
    """Pure-JAX f32 reference (mirrors the PyTorch module, unfolded weights)."""
    head_xyxy = jnp.clip(box_cxcywh_to_xyxy(head_boxes), 0.0, 1.0)
    tail_xyxy = jnp.clip(box_cxcywh_to_xyxy(tail_boxes), 0.0, 1.0)
    sp8 = pair_spatial_layout_feats(head_xyxy, tail_xyxy)
    rel_sp = sp8 @ params["w_sp"] + params["b_sp"][0]
    sem = jax.nn.softmax(obj_label_logits, axis=-1) @ params["label_emb"]
    rel_idx = generate_spatial_relation(head_xyxy, tail_xyxy, SPATIAL_ALPHA)
    one_hot = jax.nn.one_hot(rel_idx, 5, dtype=jnp.float32)
    rel_emb = one_hot @ params["rel_emb_w"]
    head_in = jnp.concatenate([head_feats, rel_sp, rel_emb], axis=-1)
    tail_in = jnp.concatenate([tail_feats, rel_sp, sem, rel_emb], axis=-1)
    h = jax.nn.relu(head_in @ params["ws1_full"] + params["bs1"][0])
    h = jax.nn.relu(h @ params["ws2"] + params["bs2"][0])
    t = jax.nn.relu(tail_in @ params["wo1_full"] + params["bo1"][0])
    t = jax.nn.relu(t @ params["wo2"] + params["bo2"][0])
    return (h + t) / 2.0


# --------------------------------- main --------------------------------------
if __name__ == "__main__":
    key = jax.random.PRNGKey(0)
    kp, k1, k2, k3, k4, k5, k6, k7 = jax.random.split(key, 8)
    params = init_params(kp)
    folded = fold_params(params)

    B, N = 2, 8
    cxcy_h = jax.random.uniform(k1, (B, N, 2), jnp.float32, 0.1, 0.9)
    wh_h = jax.random.uniform(k2, (B, N, 2), jnp.float32, 0.05, 0.4)
    head_boxes = jnp.concatenate([cxcy_h, wh_h], axis=-1)
    cxcy_t = jax.random.uniform(k3, (B, N, 2), jnp.float32, 0.1, 0.9)
    wh_t = jax.random.uniform(k4, (B, N, 2), jnp.float32, 0.05, 0.4)
    tail_boxes = jnp.concatenate([cxcy_t, wh_t], axis=-1)
    head_feats = jax.random.normal(k5, (B, N, HIDDEN_DIM), jnp.float32)
    tail_feats = jax.random.normal(k6, (B, N, HIDDEN_DIM), jnp.float32)
    obj_label_logits = jax.random.normal(k7, (B, N, NUM_OBJS), jnp.float32)

    out = relation_feature_extractor(folded, head_boxes, tail_boxes,
                                     head_feats, tail_feats, obj_label_logits)
    out = jax.block_until_ready(out)

    ref = relation_feature_extractor_ref(params, head_boxes, tail_boxes,
                                         head_feats, tail_feats, obj_label_logits)
    # Tolerance budget: bf16 packed activations + bf16 folded weights (f32 MXU accum),
    # approx-reciprocal softmax, and FP re-association from host-side weight folding.
    np.testing.assert_allclose(np.asarray(out), np.asarray(ref), rtol=3e-2, atol=3e-2)
    print("KERNEL_OK")
</pallas_src>

<mosaic_0001>
module attributes {stable_mosaic.version = 11 : i64} {
  func.func @relation_kernel(%arg0: i32, %arg1: memref<16x128xbf16, #tpu.memory_space<vmem>>, %arg2: memref<128x128xbf16, #tpu.memory_space<vmem>>, %arg3: memref<16x128xbf16, #tpu.memory_space<vmem>>, %arg4: memref<128x128xbf16, #tpu.memory_space<vmem>>, %arg5: memref<1x128xf32, #tpu.memory_space<vmem>>, %arg6: memref<16x64xf32, #tpu.memory_space<vmem>>) attributes {dimension_semantics = [#tpu.dimension_semantics<parallel>], iteration_bounds = array<i64: 1>, scalar_prefetch = 0 : i64, scratch_operands = 0 : i64, tpu.core_type = #tpu.core_type<tc>, window_params = [{transform_indices = @transform_0, window_bounds = array<i64: 16, 128>}, {pipeline_mode = #tpu.pipeline_mode<synchronous>, transform_indices = @transform_1, window_bounds = array<i64: 128, 128>}, {pipeline_mode = #tpu.pipeline_mode<synchronous>, transform_indices = @transform_2, window_bounds = array<i64: 16, 128>}, {pipeline_mode = #tpu.pipeline_mode<synchronous>, transform_indices = @transform_3, window_bounds = array<i64: 128, 128>}, {pipeline_mode = #tpu.pipeline_mode<synchronous>, transform_indices = @transform_4, window_bounds = array<i64: 1, 128>}, {transform_indices = @transform_5, window_bounds = array<i64: 16, 64>}]} {
    %c0 = arith.constant 0 : index
    %c0_0 = arith.constant 0 : index
    %0 = vector.load %arg1[%c0, %c0_0] : memref<16x128xbf16, #tpu.memory_space<vmem>>, vector<16x128xbf16>
    %1 = vector.extract_strided_slice %0 {offsets = [0, 112], sizes = [16, 16], strides = [1, 1]} : vector<16x128xbf16> to vector<16x16xbf16>
    %2 = arith.extf %1 : vector<16x16xbf16> to vector<16x16xf32>
    %cst = arith.constant dense<0xFF800000> : vector<16xf32>
    %3 = vector.multi_reduction <maximumf>, %2, %cst [1] : vector<16x16xf32> to vector<16xf32>
    %4 = vector.shape_cast %3 : vector<16xf32> to vector<16x1xf32>
    %5 = vector.broadcast %4 : vector<16x1xf32> to vector<16x16xf32>
    %6 = arith.subf %2, %5 : vector<16x16xf32>
    %7 = math.exp %6 : vector<16x16xf32>
    %cst_1 = arith.constant dense<0.000000e+00> : vector<16xf32>
    %8 = vector.multi_reduction <add>, %7, %cst_1 [1] : vector<16x16xf32> to vector<16xf32>
    %9 = vector.shape_cast %8 : vector<16xf32> to vector<16x1xf32>
    %10 = tpu.reciprocal %9 {approx = true} : vector<16x1xf32> -> vector<16x1xf32>
    %11 = vector.broadcast %10 : vector<16x1xf32> to vector<16x16xf32>
    %12 = arith.mulf %7, %11 : vector<16x16xf32>
    %c0_2 = arith.constant 0 : index
    %c0_3 = arith.constant 0 : index
    %13 = vector.load %arg2[%c0_2, %c0_3] : memref<128x128xbf16, #tpu.memory_space<vmem>>, vector<128x128xbf16>
    %cst_4 = arith.constant dense<0.000000e+00> : vector<16x128xf32>
    %14 = tpu.matmul %0, %13, %cst_4 {dimension_numbers = #tpu.dot_dimension_numbers<[1], [0], [0], [1], [0, 0, 1, 1], [], []>} : vector<16x128xbf16>, vector<128x128xbf16>, vector<16x128xf32> -> vector<16x128xf32>
    %15 = arith.truncf %12 : vector<16x16xf32> to vector<16x16xbf16>
    %c0_5 = arith.constant 0 : index
    %c0_6 = arith.constant 0 : index
    %16 = vector.load %arg3[%c0_5, %c0_6] : memref<16x128xbf16, #tpu.memory_space<vmem>>, vector<16x128xbf16>
    %cst_7 = arith.constant dense<0.000000e+00> : vector<16x128xf32>
    %17 = tpu.matmul %15, %16, %cst_7 {dimension_numbers = #tpu.dot_dimension_numbers<[1], [0], [0], [1], [0, 0, 1, 1], [], []>} : vector<16x16xbf16>, vector<16x128xbf16>, vector<16x128xf32> -> vector<16x128xf32>
    %18 = arith.addf %14, %17 : vector<16x128xf32>
    %cst_8 = arith.constant 0.000000e+00 : f32
    %19 = vector.broadcast %cst_8 : f32 to vector<16x128xf32>
    %20 = arith.maximumf %18, %19 : vector<16x128xf32>
    %21 = arith.truncf %20 : vector<16x128xf32> to vector<16x128xbf16>
    %c0_9 = arith.constant 0 : index
    %c0_10 = arith.constant 0 : index
    %22 = vector.load %arg4[%c0_9, %c0_10] : memref<128x128xbf16, #tpu.memory_space<vmem>>, vector<128x128xbf16>
    %cst_11 = arith.constant dense<0.000000e+00> : vector<16x128xf32>
    %23 = tpu.matmul %21, %22, %cst_11 {dimension_numbers = #tpu.dot_dimension_numbers<[1], [0], [0], [1], [0, 0, 1, 1], [], []>} : vector<16x128xbf16>, vector<128x128xbf16>, vector<16x128xf32> -> vector<16x128xf32>
    %c0_12 = arith.constant 0 : index
    %c0_13 = arith.constant 0 : index
    %24 = vector.load %arg5[%c0_12, %c0_13] : memref<1x128xf32, #tpu.memory_space<vmem>>, vector<1x128xf32>
    %25 = vector.broadcast %24 : vector<1x128xf32> to vector<16x128xf32>
    %26 = arith.addf %23, %25 : vector<16x128xf32>
    %cst_14 = arith.constant 0.000000e+00 : f32
    %27 = vector.broadcast %cst_14 : f32 to vector<16x128xf32>
    %28 = arith.maximumf %26, %27 : vector<16x128xf32>
    %c64_i32 = arith.constant 64 : i32
    %29 = tpu.dynamic_rotate %28 by %c64_i32 dim 1 : vector<16x128xf32>, i32 -> vector<16x128xf32>
    %30 = arith.addf %28, %29 : vector<16x128xf32>
    %cst_15 = arith.constant 5.000000e-01 : f32
    %31 = vector.broadcast %cst_15 : f32 to vector<16x128xf32>
    %32 = arith.mulf %30, %31 : vector<16x128xf32>
    %33 = vector.extract_strided_slice %32 {offsets = [0, 0], sizes = [16, 64], strides = [1, 1]} : vector<16x128xf32> to vector<16x64xf32>
    %c0_16 = arith.constant 0 : index
    %c0_17 = arith.constant 0 : index
    %34 = vector.load %arg6[%c0_16, %c0_17] : memref<16x64xf32, #tpu.memory_space<vmem>>, vector<16x64xf32>
    tpu.vector_store %arg6[%c0_16, %c0_17], %33 {strides = array<i32>} : memref<16x64xf32, #tpu.memory_space<vmem>>, vector<16x64xf32>,
    return
  }
  func.func @transform_0(%arg0: i32) -> (i32, i32) {
    %c0_i32 = arith.constant 0 : i32
    %c0_i32_0 = arith.constant 0 : i32
    return %arg0, %c0_i32 : i32, i32
  }
  func.func @transform_1(%arg0: i32) -> (i32, i32) {
    %c0_i32 = arith.constant 0 : i32
    %c0_i32_0 = arith.constant 0 : i32
    %c0_i32_1 = arith.constant 0 : i32
    return %c0_i32, %c0_i32_0 : i32, i32
  }
  func.func @transform_2(%arg0: i32) -> (i32, i32) {
    %c0_i32 = arith.constant 0 : i32
    %c0_i32_0 = arith.constant 0 : i32
    %c0_i32_1 = arith.constant 0 : i32
    return %c0_i32, %c0_i32_0 : i32, i32
  }
  func.func @transform_3(%arg0: i32) -> (i32, i32) {
    %c0_i32 = arith.constant 0 : i32
    %c0_i32_0 = arith.constant 0 : i32
    %c0_i32_1 = arith.constant 0 : i32
    return %c0_i32, %c0_i32_0 : i32, i32
  }
  func.func @transform_4(%arg0: i32) -> (i32, i32) {
    %c0_i32 = arith.constant 0 : i32
    %c0_i32_0 = arith.constant 0 : i32
    %c0_i32_1 = arith.constant 0 : i32
    return %c0_i32, %c0_i32_0 : i32, i32
  }
  func.func @transform_5(%arg0: i32) -> (i32, i32) {
    %c0_i32 = arith.constant 0 : i32
    %c0_i32_0 = arith.constant 0 : i32
    return %arg0, %c0_i32 : i32, i32
  }
}

</mosaic_0001>

<llo_original>
// kernel: tpu_custom_call.1
$region0: #{tpu_custom_call.1}
  #allocation0 [shape = 'u32[]', space=smem, size = 0x4, offset = 0x4, fixed_abs, tag = 'smem constant byte address 0x4 - core index']
  #allocation1 [shape = 'u32[144,128]{1,0:T(1,128)}', space=vmem, size = 0x12000, scoped, tag = 'internal scratch']
  %s0 = inlined_call_operand.hbm [shape: bf16[16,128], index: 0, kind: input, shape index: {}]
  %s1 = inlined_call_operand.hbm [shape: bf16[128,128], index: 1, kind: input, shape index: {}]
  %s2 = inlined_call_operand.hbm [shape: bf16[16,128], index: 2, kind: input, shape index: {}]
  %s3 = inlined_call_operand.hbm [shape: bf16[128,128], index: 3, kind: input, shape index: {}]
  %s4 = inlined_call_operand.vmem [shape: f32[1,128], index: 4, kind: input, shape index: {}]
  %s5 = inlined_call_operand.hbm [shape: f32[16,64], index: 5, kind: output, shape index: {}]
  %s6 = sld [smem:[#allocation0]]
  $region46: #{tpu_custom_call.1} parent=0
    _
  %s8 = ssub.s32 1, %s6
  %s9 = scalar_select 0, %s8, %s6
  $region1: #{tpu_custom_call.1} parent=0
    #allocation2 [shape = 'u8[4096]{0}', space=vmem, size = 0x1000, scoped, tag = 'input window, operand 0, single buffered']
    #allocation3 [shape = 's32[1]{0}', space=sflag, size = 0x4, scoped, tag = 'scoped memory for tpu_custom_call.1']
    #allocation4 [shape = 's32[1]{0}', space=sflag, size = 0x4, scoped, tag = 'scoped memory for tpu_custom_call.1']
    #allocation5 [shape = 'u8[32768]{0}', space=vmem, size = 0x8000, scoped, tag = 'input window, operand 1, single buffered']
    #allocation6 [shape = 's32[1]{0}', space=sflag, size = 0x4, scoped, tag = 'scoped memory for tpu_custom_call.1']
    #allocation7 [shape = 'u8[4096]{0}', space=vmem, size = 0x1000, scoped, tag = 'input window, operand 2, single buffered']
    #allocation8 [shape = 'u8[32768]{0}', space=vmem, size = 0x8000, scoped, tag = 'input window, operand 3, single buffered']
    #allocation9 [shape = 's32[1]{0}', space=sflag, size = 0x4, scoped, tag = 'scoped memory for tpu_custom_call.1']
    #allocation10 [shape = 'u8[8192]{0}', space=vmem, size = 0x2000, scoped, tag = 'output window, operand 0, single buffered']
    %10 = vsyncpa [#allocation3], 0
    %11 = vsyncpa [#allocation6], 0
    %12 = vsyncpa [#allocation9], 0
    %13 = vsyncpa [#allocation4], 0
    // Predicated region
    $region2: #{tpu_custom_call.1} parent=1 // pred_check
      _
    $region3: #{tpu_custom_call.1} parent=1 // pred_check_branch
      %15 = sbr.rel (0) target = $region5
    $region4: #{tpu_custom_call.1} parent=1 // pred_region
      %s17 = ssub.s32 128, 128
      %18 = vsyncadd [#allocation3], %s17
      %s19 = sshll.u32 [#allocation2], 4
      %s20 = int_to_ptr.vmem [resolvable:$true] %s19
      %25 = dma.hbm_to_vmem [thread:$0]  %s0, 128, %s20, [#allocation3], 64, 64, 4
    $region5: #{tpu_custom_call.1} parent=1 // pred_fallthru
      _
    // Predicated region
    $region6: #{tpu_custom_call.1} parent=1 // pred_check
      _
    $region7: #{tpu_custom_call.1} parent=1 // pred_check_branch
      %27 = sbr.rel (0) target = $region9
    $region8: #{tpu_custom_call.1} parent=1 // pred_region
      %s29 = ssub.s32 1024, 1024
      %30 = vsyncadd [#allocation6], %s29
      %s31 = sshll.u32 [#allocation5], 4
      %s32 = int_to_ptr.vmem [resolvable:$true] %s31
      %37 = dma.hbm_to_vmem [thread:$0]  %s1, 1024, %s32, [#allocation6], 64, 64, 4
    $region9: #{tpu_custom_call.1} parent=1 // pred_fallthru
      _
    // Predicated region
    $region10: #{tpu_custom_call.1} parent=1 // pred_check
      _
    $region11: #{tpu_custom_call.1} parent=1 // pred_check_branch
      %39 = sbr.rel (0) target = $region13
    $region12: #{tpu_custom_call.1} parent=1 // pred_region
      %s41 = ssub.s32 128, 128
      %42 = vsyncadd [#allocation6], %s41
      %s43 = sshll.u32 [#allocation7], 4
      %s44 = int_to_ptr.vmem [resolvable:$true] %s43
      %49 = dma.hbm_to_vmem [thread:$0]  %s2, 128, %s44, [#allocation6], 64, 64, 4
    $region13: #{tpu_custom_call.1} parent=1 // pred_fallthru
      _
    // Predicated region
    $region14: #{tpu_custom_call.1} parent=1 // pred_check
      _
    $region15: #{tpu_custom_call.1} parent=1 // pred_check_branch
      %51 = sbr.rel (0) target = $region17
    $region16: #{tpu_custom_call.1} parent=1 // pred_region
      %s53 = ssub.s32 1024, 1024
      %54 = vsyncadd [#allocation9], %s53
      %s55 = sshll.u32 [#allocation8], 4
      %s56 = int_to_ptr.vmem [resolvable:$true] %s55
      %61 = dma.hbm_to_vmem [thread:$0]  %s3, 1024, %s56, [#allocation9], 64, 64, 4
    $region17: #{tpu_custom_call.1} parent=1 // pred_fallthru
      _
    // Predicated region
    $region18: #{tpu_custom_call.1} parent=1 // pred_check
      _
    $region19: #{tpu_custom_call.1} parent=1 // pred_check_branch
      %63 = sbr.rel (0) target = $region21
    $region20: #{tpu_custom_call.1} parent=1 // pred_region
      _
    $region21: #{tpu_custom_call.1} parent=1 // pred_fallthru
      _
    // Predicated region
    $region22: #{tpu_custom_call.1} parent=1 // pred_check
      _
    $region23: #{tpu_custom_call.1} parent=1 // pred_check_branch
      %65 = sbr.rel (0) target = $region25
    $region24: #{tpu_custom_call.1} parent=1 // pred_region
      %66 = dma.done [#allocation3], 128
    $region25: #{tpu_custom_call.1} parent=1 // pred_fallthru
      _
    // Predicated region
    $region26: #{tpu_custom_call.1} parent=1 // pred_check
      _
    $region27: #{tpu_custom_call.1} parent=1 // pred_check_branch
      %68 = sbr.rel (0) target = $region29
    $region28: #{tpu_custom_call.1} parent=1 // pred_region
      %69 = dma.done [#allocation6], 1024
    $region29: #{tpu_custom_call.1} parent=1 // pred_fallthru
      _
    // Predicated region
    $region30: #{tpu_custom_call.1} parent=1 // pred_check
      _
    $region31: #{tpu_custom_call.1} parent=1 // pred_check_branch
      %71 = sbr.rel (0) target = $region33
    $region32: #{tpu_custom_call.1} parent=1 // pred_region
      %72 = dma.done [#allocation6], 128
    $region33: #{tpu_custom_call.1} parent=1 // pred_fallthru
      _
    // Predicated region
    $region34: #{tpu_custom_call.1} parent=1 // pred_check
      _
    $region35: #{tpu_custom_call.1} parent=1 // pred_check_branch
      %74 = sbr.rel (0) target = $region37
    $region36: #{tpu_custom_call.1} parent=1 // pred_region
      %75 = dma.done [#allocation9], 1024
    $region37: #{tpu_custom_call.1} parent=1 // pred_fallthru
      _
    %v77 = vld [vmem:[#allocation2] sm:$0xf]
    %v78 = vld [vmem:[#allocation2 + $0x4] sm:$0xf]
    %v79 = vunpack.c.l.bf16 %v77
    %v80 = vunpack.c.l.bf16 %v78
    %vm81 = vcmask 1048448
    %v82 = vsel %vm81, %v79, -inf
    %83 = vmax.xlane.f32.xlu0 %v82
    %v84 = vpop.xlane.xlu0 %83
    %v85 = vsel %vm81, %v80, -inf
    %86 = vmax.xlane.f32.xlu0 %v85
    %v87 = vpop.xlane.xlu0 %86
    %v88 = vsub.f32 %v79, %v84
    %v89 = vsub.f32 %v80, %v87
    %v90 = vmul.f32 %v88, 1.442695
    %v91 = vpow.pop %v90
    %v92 = vmul.f32 %v89, 1.442695
    %v93 = vpow.pop %v92
    %96 = vrot.lane.b32.xlu0 %v91, 16
    %v97 = vpop.permute.xlu0 %96
    %98 = vrot.lane.b32.xlu0 %v93, 16
    %v99 = vpop.permute.xlu0 %98
    %vm102 = vcmask 130048
    %v103 = vsel %vm102, %v97, 0.0
    %104 = vadd.xlane.f32.xlu0 %v103
    %v105 = vpop.xlane.xlu0 %104
    %v106 = vsel %vm102, %v99, 0.0
    %107 = vadd.xlane.f32.xlu0 %v106
    %v108 = vpop.xlane.xlu0 %107
    %v109 = vrcp.pop %v105
    %v110 = vrcp.pop %v108
    %v111 = vmul.f32 %v91, %v109
    %v112 = vmul.f32 %v93, %v110
    %v113 = vld [vmem:[#allocation5] sm:$0xf]
    %v114 = vld [vmem:[#allocation5 + $0x4] sm:$0xf]
    %v115 = vld [vmem:[#allocation5 + $0x8] sm:$0xf]
    %v116 = vld [vmem:[#allocation5 + $0xc] sm:$0xf]
    %v117 = vld [vmem:[#allocation5 + $0x10] sm:$0xf]
    %v118 = vld [vmem:[#allocation5 + $0x14] sm:$0xf]
    %v119 = vld [vmem:[#allocation5 + $0x18] sm:$0xf]
    %v120 = vld [vmem:[#allocation5 + $0x1c] sm:$0xf]
    %v121 = vld [vmem:[#allocation5 + $0x20] sm:$0xf]
    %v122 = vld [vmem:[#allocation5 + $0x24] sm:$0xf]
    %v123 = vld [vmem:[#allocation5 + $0x28] sm:$0xf]
    %v124 = vld [vmem:[#allocation5 + $0x2c] sm:$0xf]
    %v125 = vld [vmem:[#allocation5 + $0x30] sm:$0xf]
    %v126 = vld [vmem:[#allocation5 + $0x34] sm:$0xf]
    %v127 = vld [vmem:[#allocation5 + $0x38] sm:$0xf]
    %v128 = vld [vmem:[#allocation5 + $0x3c] sm:$0xf]
    %v129 = vpack.c.bf16 %v112, %v111
    %v130 = vld [vmem:[#allocation7] sm:$0xf]
    %v131 = vld [vmem:[#allocation7 + $0x4] sm:$0xf]
    %133 = vrot.lane.b32.xlu0 %v129, 16
    %v134 = vpop.permute.xlu0 %133
    %v137 = vunpack.c.l.b16 %v130
    %v138 = vunpack.c.l.b16 %v131
    %v139 = vpack.c.b16 %v138, %v137
    %v142 = vsel %vm102, %v134, 0
    %144 = vmatprep.subr.bf16.mxu0 0
    %145 = vmatpush1.bf16.msra.mxu0 0
    %146 = vmatprep.subr.bf16.mxu0 0
    %147 = vmatpush1.bf16.msra.mxu0 0
    %148 = vmatprep.subr.bf16.mxu0 0
    %149 = vmatpush1.bf16.msra.mxu0 0
    %150 = vmatprep.subr.bf16.mxu0 0
    %151 = vmatpush1.bf16.msra.mxu0 0
    %152 = vmatprep.subr.bf16.mxu0 0
    %153 = vmatpush1.bf16.msra.mxu0 0
    %154 = vmatprep.subr.bf16.mxu0 0
    %155 = vmatpush1.bf16.msra.mxu0 0
    %156 = vmatprep.subr.bf16.mxu0 0
    %157 = vmatpush1.bf16.msra.mxu0 0
    %158 = vmatprep.subr.bf16.mxu0 0
    %159 = vmatpush1.bf16.msra.mxu0 %v139
    %160 = vmatprep.subr.bf16.mxu0 0
    %161 = vmatpush2.bf16.msra.mxu0 0
    %162 = vmatprep.subr.bf16.mxu0 0
    %163 = vmatpush2.bf16.msra.mxu0 0
    %164 = vmatprep.subr.bf16.mxu0 0
    %165 = vmatpush2.bf16.msra.mxu0 0
    %166 = vmatprep.subr.bf16.mxu0 0
    %167 = vmatpush2.bf16.msra.mxu0 0
    %168 = vmatprep.subr.bf16.mxu0 0
    %169 = vmatpush2.bf16.msra.mxu0 0
    %170 = vmatprep.subr.bf16.mxu0 0
    %171 = vmatpush2.bf16.msra.mxu0 0
    %172 = vmatprep.subr.bf16.mxu0 0
    %173 = vmatpush2.bf16.msra.mxu0 0
    %174 = vmatprep.subr.bf16.mxu0 0
    %175 = vmatpush2.bf16.msra.mxu0 0
    %176 = vmatprep.mubr.bf16.mxu0 0
    %177 = vmatmul.mubr.bf16.gmra.mxu0 %v142
    %v178 = vpop.f32.mrf.mxu0
    %v179 = vadd.f32 0.0, %v178
    %v180 = vpop.f32.mrf.mxu0
    %v181 = vpop.f32.mrf.mxu0
    %v182 = vadd.f32 0.0, %v181
    %v183 = vpop.f32.mrf.mxu0
    %184 = vdwg.mxu0
    %v187 = vunpack.c.l.b16 %v77
    %v188 = vunpack.c.l.b16 %v78
    %v189 = vpack.c.b16 %v188, %v187
    %v207 = vunpack.c.l.b16 %v113
    %v208 = vunpack.c.l.b16 %v114
    %v209 = vunpack.c.l.b16 %v115
    %v210 = vunpack.c.l.b16 %v116
    %v211 = vunpack.c.l.b16 %v117
    %v212 = vunpack.c.l.b16 %v118
    %v213 = vunpack.c.l.b16 %v119
    %v214 = vunpack.c.l.b16 %v120
    %v215 = vunpack.c.l.b16 %v121
    %v216 = vunpack.c.l.b16 %v122
    %v217 = vunpack.c.l.b16 %v123
    %v218 = vunpack.c.l.b16 %v124
    %v219 = vunpack.c.l.b16 %v125
    %v220 = vunpack.c.l.b16 %v126
    %v221 = vunpack.c.l.b16 %v127
    %v222 = vunpack.c.l.b16 %v128
    %v223 = vpack.c.b16 %v208, %v207
    %v224 = vpack.c.b16 %v210, %v209
    %v225 = vpack.c.b16 %v212, %v211
    %v226 = vpack.c.b16 %v214, %v213
    %v227 = vpack.c.b16 %v216, %v215
    %v228 = vpack.c.b16 %v218, %v217
    %v229 = vpack.c.b16 %v220, %v219
    %v230 = vpack.c.b16 %v222, %v221
    %239 = vmatprep.subr.bf16.mxu0 0
    %240 = vmatpush1.bf16.msra.mxu0 %v230
    %241 = vmatprep.subr.bf16.mxu0 0
    %242 = vmatpush1.bf16.msra.mxu0 %v229
    %243 = vmatprep.subr.bf16.mxu0 0
    %244 = vmatpush1.bf16.msra.mxu0 %v228
    %245 = vmatprep.subr.bf16.mxu0 0
    %246 = vmatpush1.bf16.msra.mxu0 %v227
    %247 = vmatprep.subr.bf16.mxu0 0
    %248 = vmatpush1.bf16.msra.mxu0 %v226
    %249 = vmatprep.subr.bf16.mxu0 0
    %250 = vmatpush1.bf16.msra.mxu0 %v225
    %251 = vmatprep.subr.bf16.mxu0 0
    %252 = vmatpush1.bf16.msra.mxu0 %v224
    %253 = vmatprep.subr.bf16.mxu0 0
    %254 = vmatpush1.bf16.msra.mxu0 %v223
    %255 = vmatprep.subr.bf16.mxu0 0
    %256 = vmatpush2.bf16.msra.mxu0 0
    %257 = vmatprep.subr.bf16.mxu0 0
    %258 = vmatpush2.bf16.msra.mxu0 0
    %259 = vmatprep.subr.bf16.mxu0 0
    %260 = vmatpush2.bf16.msra.mxu0 0
    %261 = vmatprep.subr.bf16.mxu0 0
    %262 = vmatpush2.bf16.msra.mxu0 0
    %263 = vmatprep.subr.bf16.mxu0 0
    %264 = vmatpush2.bf16.msra.mxu0 0
    %265 = vmatprep.subr.bf16.mxu0 0
    %266 = vmatpush2.bf16.msra.mxu0 0
    %267 = vmatprep.subr.bf16.mxu0 0
    %268 = vmatpush2.bf16.msra.mxu0 0
    %269 = vmatprep.subr.bf16.mxu0 0
    %270 = vmatpush2.bf16.msra.mxu0 0
    %271 = vmatprep.mubr.bf16.mxu0 0
    %272 = vmatmul.mubr.bf16.gmra.mxu0 %v189
    %v273 = vpop.f32.mrf.mxu0
    %v274 = vadd.f32 %v179, %v273
    %v275 = vpop.f32.mrf.mxu0
    %v276 = vpop.f32.mrf.mxu0
    %v277 = vadd.f32 %v182, %v276
    %v278 = vpop.f32.mrf.mxu0
    %279 = vdwg.mxu0
    %v280 = vmax.f32 %v274, 0.0
    %v281 = vmax.f32 %v277, 0.0
    %v282 = vpack.c.bf16 %v281, %v280
    %v283 = vld [vmem:[#allocation8] sm:$0xf]
    %v284 = vld [vmem:[#allocation8 + $0x4] sm:$0xf]
    %v285 = vld [vmem:[#allocation8 + $0x8] sm:$0xf]
    %v286 = vld [vmem:[#allocation8 + $0xc] sm:$0xf]
    %v287 = vld [vmem:[#allocation8 + $0x10] sm:$0xf]
    %v288 = vld [vmem:[#allocation8 + $0x14] sm:$0xf]
    %v289 = vld [vmem:[#allocation8 + $0x18] sm:$0xf]
    %v290 = vld [vmem:[#allocation8 + $0x1c] sm:$0xf]
    %v291 = vld [vmem:[#allocation8 + $0x20] sm:$0xf]
    %v292 = vld [vmem:[#allocation8 + $0x24] sm:$0xf]
    %v293 = vld [vmem:[#allocation8 + $0x28] sm:$0xf]
    %v294 = vld [vmem:[#allocation8 + $0x2c] sm:$0xf]
    %v295 = vld [vmem:[#allocation8 + $0x30] sm:$0xf]
    %v296 = vld [vmem:[#allocation8 + $0x34] sm:$0xf]
    %v297 = vld [vmem:[#allocation8 + $0x38] sm:$0xf]
    %v298 = vld [vmem:[#allocation8 + $0x3c] sm:$0xf]
    %v299 = vld [vmem:[%s4] sm:$0x1]
    %v301 = vlaneseq
    %v302 = vshrl.u32 %v301, 7
    %v303 = vsub.s32 0, %v302
    %v304 = vrot.slane %v299, %v303
    %v322 = vunpack.c.l.b16 %v283
    %v323 = vunpack.c.l.b16 %v284
    %v324 = vunpack.c.l.b16 %v285
    %v325 = vunpack.c.l.b16 %v286
    %v326 = vunpack.c.l.b16 %v287
    %v327 = vunpack.c.l.b16 %v288
    %v328 = vunpack.c.l.b16 %v289
    %v329 = vunpack.c.l.b16 %v290
    %v330 = vunpack.c.l.b16 %v291
    %v331 = vunpack.c.l.b16 %v292
    %v332 = vunpack.c.l.b16 %v293
    %v333 = vunpack.c.l.b16 %v294
    %v334 = vunpack.c.l.b16 %v295
    %v335 = vunpack.c.l.b16 %v296
    %v336 = vunpack.c.l.b16 %v297
    %v337 = vunpack.c.l.b16 %v298
    %v338 = vpack.c.b16 %v323, %v322
    %v339 = vpack.c.b16 %v325, %v324
    %v340 = vpack.c.b16 %v327, %v326
    %v341 = vpack.c.b16 %v329, %v328
    %v342 = vpack.c.b16 %v331, %v330
    %v343 = vpack.c.b16 %v333, %v332
    %v344 = vpack.c.b16 %v335, %v334
    %v345 = vpack.c.b16 %v337, %v336
    %354 = vmatprep.subr.bf16.mxu0 0
    %355 = vmatpush1.bf16.msra.mxu0 %v345
    %356 = vmatprep.subr.bf16.mxu0 0
    %357 = vmatpush1.bf16.msra.mxu0 %v344
    %358 = vmatprep.subr.bf16.mxu0 0
    %359 = vmatpush1.bf16.msra.mxu0 %v343
    %360 = vmatprep.subr.bf16.mxu0 0
    %361 = vmatpush1.bf16.msra.mxu0 %v342
    %362 = vmatprep.subr.bf16.mxu0 0
    %363 = vmatpush1.bf16.msra.mxu0 %v341
    %364 = vmatprep.subr.bf16.mxu0 0
    %365 = vmatpush1.bf16.msra.mxu0 %v340
    %366 = vmatprep.subr.bf16.mxu0 0
    %367 = vmatpush1.bf16.msra.mxu0 %v339
    %368 = vmatprep.subr.bf16.mxu0 0
    %369 = vmatpush1.bf16.msra.mxu0 %v338
    %370 = vmatprep.subr.bf16.mxu0 0
    %371 = vmatpush2.bf16.msra.mxu0 0
    %372 = vmatprep.subr.bf16.mxu0 0
    %373 = vmatpush2.bf16.msra.mxu0 0
    %374 = vmatprep.subr.bf16.mxu0 0
    %375 = vmatpush2.bf16.msra.mxu0 0
    %376 = vmatprep.subr.bf16.mxu0 0
    %377 = vmatpush2.bf16.msra.mxu0 0
    %378 = vmatprep.subr.bf16.mxu0 0
    %379 = vmatpush2.bf16.msra.mxu0 0
    %380 = vmatprep.subr.bf16.mxu0 0
    %381 = vmatpush2.bf16.msra.mxu0 0
    %382 = vmatprep.subr.bf16.mxu0 0
    %383 = vmatpush2.bf16.msra.mxu0 0
    %384 = vmatprep.subr.bf16.mxu0 0
    %385 = vmatpush2.bf16.msra.mxu0 0
    %386 = vmatprep.mubr.bf16.mxu0 0
    %387 = vmatmul.mubr.bf16.gmra.mxu0 %v282
    %v388 = vpop.f32.mrf.mxu0
    %v389 = vadd.f32 %v304, %v388
    %v390 = vpop.f32.mrf.mxu0
    %v391 = vpop.f32.mrf.mxu0
    %v392 = vadd.f32 %v304, %v391
    %v393 = vpop.f32.mrf.mxu0
    %394 = vdwg.mxu0
    %v395 = vmax.f32 %v389, 0.0
    %v396 = vmax.f32 %v392, 0.0
    %397 = vrot.lane.b32.xlu0 %v395, 64
    %v398 = vpop.permute.xlu0 %397
    %399 = vrot.lane.b32.xlu0 %v396, 64
    %v400 = vpop.permute.xlu0 %399
    %v401 = vadd.f32 %v395, %v398
    %v402 = vadd.f32 %v396, %v400
    %v403 = vmul.f32 %v401, 0.5
    %v404 = vmul.f32 %v402, 0.5
    %vm405 = vcmask 523264
    %406 = vst.msk [vmem:[#allocation10] sm:$0xff] %vm405, %v403
    %407 = vst.msk [vmem:[#allocation10 + $0x8] sm:$0xff] %vm405, %v404
    // Predicated region
    $region38: #{tpu_custom_call.1} parent=1 // pred_check
      _
    $region39: #{tpu_custom_call.1} parent=1 // pred_check_branch
      %409 = sbr.rel (0) target = $region41
    $region40: #{tpu_custom_call.1} parent=1 // pred_region
      %s411 = ssub.s32 256, 256
      %412 = vsyncadd [#allocation4], %s411
      %s413 = sshll.u32 [#allocation10], 4
      %s414 = int_to_ptr.vmem [resolvable:$true] %s413
      %419 = dma.vmem_to_hbm [thread:$0]  %s414, 256, %s5, [#allocation4], 128, 128, 8
    $region41: #{tpu_custom_call.1} parent=1 // pred_fallthru
      _
    // Predicated region
    $region42: #{tpu_custom_call.1} parent=1 // pred_check
      _
    $region43: #{tpu_custom_call.1} parent=1 // pred_check_branch
      %421 = sbr.rel (0) target = $region45
    $region44: #{tpu_custom_call.1} parent=1 // pred_region
      %422 = dma.done [#allocation4], 256
    $region45: #{tpu_custom_call.1} parent=1 // pred_fallthru
      _
    %423 = vsyncpa [#allocation3], 1
    %424 = vsyncpa [#allocation6], 1
    %425 = vsyncpa [#allocation9], 1
    %426 = vsyncpa [#allocation4], 1

</llo_original>
